<compile_context>
chip_gen: v5e
topology: v5e:2x2
jax: 0.10.0
libtpu: 0.0.40
codegen_flags: <defaults>
</compile_context>

<pallas_src>
import math

import jax
import jax.numpy as jnp
from jax import lax
from jax.experimental import pallas as pl
from jax.experimental.pallas import tpu as pltpu


# ---------------------------------------------------------------------------
# Pallas kernel: fused matmul (conv-as-im2col, lane-packed) + bias + LayerNorm
# ---------------------------------------------------------------------------
def patch_embed_kernel(x_ref, w_ref, p_ref, prm_ref, o_ref):
    # x_ref:   (tm/pack, pack*K)     packed im2col patches tile (compute_dtype)
    # w_ref:   (pack*K, pack*C)      block-diagonal conv weight kron(I, W)
    # p_ref:   (pack*C, pack*C)      group-mean matrix          kron(I, 11^T/C)  (f32)
    # prm_ref: (8, pack*C)           row 0 = conv bias, row 1 = LN gamma, row 2 = LN beta
    # o_ref:   (tm/pack, pack*C)     packed output tokens (f32)
    y = jnp.dot(x_ref[...], w_ref[...], preferred_element_type=jnp.float32)
    prm = prm_ref[...]
    y = y + prm[0:1, :]                                             # conv bias
    # Per-token LayerNorm stats on the MXU, already broadcast over each token's
    # C_out-lane group.  Variance is computed on centered values (numerically
    # robust, matches the two-pass torch reference even on the bf16 path).
    mu = jnp.dot(y, p_ref[...], preferred_element_type=jnp.float32)
    yc = y - mu
    var = jnp.dot(yc * yc, p_ref[...], preferred_element_type=jnp.float32)
    scale = prm[1:2, :] * lax.rsqrt(var + 1e-6)
    o_ref[...] = (yc * scale + prm[2:3, :]).astype(o_ref.dtype)


# ---------------------------------------------------------------------------
# Tiling / VMEM helpers
# ---------------------------------------------------------------------------
def _vmem_budget():
    """(working-set budget, vmem_limit cap) gated on the part's VMEM size."""
    try:
        cap = pltpu.get_tpu_info().vmem_capacity_bytes
    except Exception:
        cap = 64 << 20                       # be conservative (v7x-sized VMEM)
    if cap <= (64 << 20):                    # v7x: 64 MiB per TensorCore
        return 24 << 20, 48 << 20
    return 40 << 20, 64 << 20                # v5e / v6e: 128 MiB physical


def _pick_tile(M, K_p, C_p, pack, tm_req, in_bytes, budget):
    """Row tile (in tokens): near-even split, >=2 tiles when possible, fits budget."""
    row_align = 8 * pack                     # packed-row dim must be a multiple of 8
    n_rows = pl.cdiv(M, row_align)           # number of 8-sublane packed-row groups
    # VMEM cost model: in/out tiles double-buffered, constants single-buffered.
    per_row = 2 * K_p * in_bytes + 2 * C_p * 4
    const = K_p * C_p * in_bytes + C_p * C_p * 4 + 8 * C_p * 4
    max_tp = max(8, ((budget - const) // per_row) // 8 * 8) if budget > const else 8
    tm_cap = max(row_align, (min(tm_req, max_tp * pack) // row_align) * row_align)
    # Split tokens into near-equal tiles; target >=2 grid steps (v7x has 2 TCs).
    n_tiles = max(pl.cdiv(n_rows * row_align, tm_cap), min(2, n_rows))
    tm = row_align * pl.cdiv(n_rows, n_tiles)
    return tm, const + per_row * (tm // pack)


# ---------------------------------------------------------------------------
# Wrapper
# ---------------------------------------------------------------------------
def overlap_patch_embedding(x, weight, bias, gamma, beta, stride, *,
                            tm=1024, compute_dtype=jnp.bfloat16):
    """x: (B, C_in, H, W) NCHW.  weight: (C_out, C_in, kh, kw) OIHW (torch layout)."""
    B, C_in, H, W = x.shape
    C_out, _, kh, kw = weight.shape
    ph, pw = kh // 2, kw // 2

    H_out = (H + 2 * ph - kh) // stride + 1
    W_out = (W + 2 * pw - kw) // stride + 1
    K = C_in * kh * kw
    M = B * H_out * W_out

    # Lane packing: fold `pack` tokens into one 128-wide output row so stores are
    # full-lane unmasked vst.  If C_out is not a divisor of 128 this falls back to
    # pack=1 (still correct, but lanes < 128 reintroduce masked partial stores).
    pack = 128 // C_out if (C_out < 128 and 128 % C_out == 0) else 1
    C_p = pack * C_out
    K_p = pack * K

    # ---- glue: im2col as ONE fused gather (feature order: C_in major, kh, kw) ----
    patches = lax.conv_general_dilated_patches(
        x, filter_shape=(kh, kw), window_strides=(stride, stride),
        padding=[(ph, ph), (pw, pw)],
        dimension_numbers=("NCHW", "OIHW", "NCHW"))                  # (B, K, Ho, Wo)
    patches = jnp.transpose(patches.reshape(B, K, H_out * W_out), (0, 2, 1))
    patches = patches.reshape(M, K)

    # ---- tile selection + minimal padding to a tile multiple ----
    in_bytes = jnp.dtype(compute_dtype).itemsize
    budget, limit_cap = _vmem_budget()
    tm_eff, vmem_est = _pick_tile(M, K_p, C_p, pack, tm, in_bytes, budget)
    M_pad = pl.cdiv(M, tm_eff) * tm_eff
    if M_pad != M:
        patches = jnp.pad(patches, ((0, M_pad - M), (0, 0)))
    # Free (contiguous) view: `pack` consecutive tokens per packed row.
    patches_p = patches.astype(compute_dtype).reshape(M_pad // pack, K_p)

    # ---- packed parameters ----
    w2d = weight.reshape(C_out, K).T.astype(jnp.float32)                       # (K, C_out)
    eye = jnp.eye(pack, dtype=jnp.float32)
    w_blk = jnp.kron(eye, w2d).astype(compute_dtype)                           # (K_p, C_p)
    p_blk = jnp.kron(eye, jnp.full((C_out, C_out), 1.0 / C_out, jnp.float32))  # (C_p, C_p)
    prm = jnp.zeros((8, C_p), jnp.float32)
    prm = prm.at[0].set(jnp.tile(bias.astype(jnp.float32), pack))
    prm = prm.at[1].set(jnp.tile(gamma.astype(jnp.float32), pack))
    prm = prm.at[2].set(jnp.tile(beta.astype(jnp.float32), pack))

    tmp_rows = tm_eff // pack
    grid = (M_pad // tm_eff,)
    const_bytes = K_p * C_p * in_bytes + C_p * C_p * 4 + 8 * C_p * 4
    vmem_limit = int(min(limit_cap, max(16 << 20, vmem_est + const_bytes + (4 << 20))))

    def _call(single_buffer_consts):
        const_kw = ({"pipeline_mode": pl.Buffered(1)} if single_buffer_consts else {})
        return pl.pallas_call(
            patch_embed_kernel,
            out_shape=jax.ShapeDtypeStruct((M_pad // pack, C_p), jnp.float32),
            grid_spec=pltpu.PrefetchScalarGridSpec(
                num_scalar_prefetch=0,
                grid=grid,
                in_specs=[
                    pl.BlockSpec((tmp_rows, K_p), lambda i: (i, 0)),
                    pl.BlockSpec((K_p, C_p), lambda i: (0, 0), **const_kw),
                    pl.BlockSpec((C_p, C_p), lambda i: (0, 0), **const_kw),
                    pl.BlockSpec((8, C_p), lambda i: (0, 0), **const_kw),
                ],
                out_specs=pl.BlockSpec((tmp_rows, C_p), lambda i: (i, 0)),
            ),
            compiler_params=pltpu.CompilerParams(
                dimension_semantics=("parallel",),
                vmem_limit_bytes=vmem_limit),
        )(patches_p, w_blk, p_blk, prm)

    try:
        out = _call(True)
    except Exception:
        # Fallback if pl.Buffered(1) single-buffering is unsupported on this jax
        # version: default double-buffered constants (previously validated path).
        out = _call(False)

    # Free reshape back to token-major layout, drop padding.
    tokens = out.reshape(M_pad, C_out)[:M].reshape(B, H_out * W_out, C_out)
    return tokens, H_out, W_out


# ---------------------------------------------------------------------------
# Pure-JAX reference (for correctness check)
# ---------------------------------------------------------------------------
def reference(x, weight, bias, gamma, beta, stride):
    kh, kw = weight.shape[2], weight.shape[3]
    y = lax.conv_general_dilated(
        x, weight, window_strides=(stride, stride),
        padding=[(kh // 2, kh // 2), (kw // 2, kw // 2)],
        dimension_numbers=("NCHW", "OIHW", "NCHW"))
    y = y + bias[None, :, None, None]
    B, C, Ho, Wo = y.shape
    t = jnp.transpose(y.reshape(B, C, Ho * Wo), (0, 2, 1))
    mu = jnp.mean(t, axis=-1, keepdims=True)
    var = jnp.mean((t - mu) ** 2, axis=-1, keepdims=True)
    tn = (t - mu) / jnp.sqrt(var + 1e-6)
    return tn * gamma + beta, Ho, Wo


if __name__ == "__main__":
    # Module config (idx=0): in_chans=4, embed_dim=32, patch_size=7, stride=4
    B, C_in, H, W = 2, 4, 16, 16
    C_out, kh, kw, stride = 32, 7, 7, 4

    key = jax.random.PRNGKey(0)
    kx, kw_key = jax.random.split(key)

    x = jax.random.normal(kx, (B, C_in, H, W), dtype=jnp.float32)

    # Deterministic init matching the torch module's init_params():
    fan_out = kh * kw * C_out
    weight = jax.random.normal(kw_key, (C_out, C_in, kh, kw), dtype=jnp.float32) \
             * math.sqrt(2.0 / fan_out)
    bias = jnp.zeros((C_out,), jnp.float32)
    gamma = jnp.ones((C_out,), jnp.float32)    # LayerNorm weight = 1
    beta = jnp.zeros((C_out,), jnp.float32)    # LayerNorm bias   = 0

    ref_tokens, rHo, rWo = reference(x, weight, bias, gamma, beta, stride)

    # f32 path: exact semantics, tight tolerance against the f32 conv+LN reference.
    tok32, Ho, Wo = overlap_patch_embedding(x, weight, bias, gamma, beta, stride,
                                            compute_dtype=jnp.float32)
    tok32 = jax.block_until_ready(tok32)
    assert (Ho, Wo) == (rHo, rWo)
    assert tok32.shape == (B, Ho * Wo, C_out)
    assert jnp.allclose(tok32, ref_tokens, rtol=1e-4, atol=1e-4), \
        float(jnp.max(jnp.abs(tok32 - ref_tokens)))

    # Default (bf16 stream) path: halves the dominant HBM reads; looser tolerance
    # appropriate for bf16 conv inputs feeding a unit-scale LayerNorm output.
    tok16, Ho16, Wo16 = overlap_patch_embedding(x, weight, bias, gamma, beta, stride)
    tok16 = jax.block_until_ready(tok16)
    assert (Ho16, Wo16) == (rHo, rWo)
    assert jnp.allclose(tok16, ref_tokens, rtol=5e-2, atol=5e-2), \
        float(jnp.max(jnp.abs(tok16 - ref_tokens)))

    print("KERNEL_OK")
</pallas_src>

<mosaic_0001>
module attributes {stable_mosaic.version = 11 : i64} {
  func.func @patch_embed_kernel(%arg0: i32, %arg1: memref<8x784xf32, #tpu.memory_space<vmem>>, %arg2: memref<784x128xf32, #tpu.memory_space<vmem>>, %arg3: memref<128x128xf32, #tpu.memory_space<vmem>>, %arg4: memref<8x128xf32, #tpu.memory_space<vmem>>, %arg5: memref<8x128xf32, #tpu.memory_space<vmem>>) attributes {dimension_semantics = [#tpu.dimension_semantics<parallel>], iteration_bounds = array<i64: 1>, scalar_prefetch = 0 : i64, scratch_operands = 0 : i64, tpu.core_type = #tpu.core_type<tc>, window_params = [{transform_indices = @transform_0, window_bounds = array<i64: 8, 784>}, {pipeline_mode = #tpu.pipeline_mode<synchronous>, transform_indices = @transform_1, window_bounds = array<i64: 784, 128>}, {pipeline_mode = #tpu.pipeline_mode<synchronous>, transform_indices = @transform_2, window_bounds = array<i64: 128, 128>}, {pipeline_mode = #tpu.pipeline_mode<synchronous>, transform_indices = @transform_3, window_bounds = array<i64: 8, 128>}, {transform_indices = @transform_4, window_bounds = array<i64: 8, 128>}]} {
    %c0 = arith.constant 0 : index
    %c0_0 = arith.constant 0 : index
    %0 = vector.load %arg1[%c0, %c0_0] : memref<8x784xf32, #tpu.memory_space<vmem>>, vector<8x784xf32>
    %c0_1 = arith.constant 0 : index
    %c0_2 = arith.constant 0 : index
    %1 = vector.load %arg2[%c0_1, %c0_2] : memref<784x128xf32, #tpu.memory_space<vmem>>, vector<784x128xf32>
    %cst = arith.constant dense<0.000000e+00> : vector<8x128xf32>
    %2 = tpu.matmul %0, %1, %cst {dimension_numbers = #tpu.dot_dimension_numbers<[1], [0], [0], [1], [0, 0, 1, 1], [], []>} : vector<8x784xf32>, vector<784x128xf32>, vector<8x128xf32> -> vector<8x128xf32>
    %c0_3 = arith.constant 0 : index
    %c0_4 = arith.constant 0 : index
    %3 = vector.load %arg4[%c0_3, %c0_4] : memref<8x128xf32, #tpu.memory_space<vmem>>, vector<8x128xf32>
    %4 = vector.extract_strided_slice %3 {offsets = [0, 0], sizes = [1, 128], strides = [1, 1]} : vector<8x128xf32> to vector<1x128xf32>
    %5 = vector.broadcast %4 : vector<1x128xf32> to vector<8x128xf32>
    %6 = arith.addf %2, %5 : vector<8x128xf32>
    %c0_5 = arith.constant 0 : index
    %c0_6 = arith.constant 0 : index
    %7 = vector.load %arg3[%c0_5, %c0_6] : memref<128x128xf32, #tpu.memory_space<vmem>>, vector<128x128xf32>
    %cst_7 = arith.constant dense<0.000000e+00> : vector<8x128xf32>
    %8 = tpu.matmul %6, %7, %cst_7 {dimension_numbers = #tpu.dot_dimension_numbers<[1], [0], [0], [1], [0, 0, 1, 1], [], []>} : vector<8x128xf32>, vector<128x128xf32>, vector<8x128xf32> -> vector<8x128xf32>
    %9 = arith.subf %6, %8 : vector<8x128xf32>
    %10 = arith.mulf %9, %9 : vector<8x128xf32>
    %c0_8 = arith.constant 0 : index
    %c0_9 = arith.constant 0 : index
    %11 = vector.load %arg3[%c0_8, %c0_9] : memref<128x128xf32, #tpu.memory_space<vmem>>, vector<128x128xf32>
    %cst_10 = arith.constant dense<0.000000e+00> : vector<8x128xf32>
    %12 = tpu.matmul %10, %11, %cst_10 {dimension_numbers = #tpu.dot_dimension_numbers<[1], [0], [0], [1], [0, 0, 1, 1], [], []>} : vector<8x128xf32>, vector<128x128xf32>, vector<8x128xf32> -> vector<8x128xf32>
    %13 = vector.extract_strided_slice %3 {offsets = [1, 0], sizes = [1, 128], strides = [1, 1]} : vector<8x128xf32> to vector<1x128xf32>
    %cst_11 = arith.constant 9.99999997E-7 : f32
    %14 = vector.broadcast %cst_11 : f32 to vector<8x128xf32>
    %15 = arith.addf %12, %14 : vector<8x128xf32>
    %16 = math.rsqrt %15 : vector<8x128xf32>
    %17 = vector.broadcast %13 : vector<1x128xf32> to vector<8x128xf32>
    %18 = arith.mulf %17, %16 : vector<8x128xf32>
    %19 = arith.mulf %9, %18 : vector<8x128xf32>
    %20 = vector.extract_strided_slice %3 {offsets = [2, 0], sizes = [1, 128], strides = [1, 1]} : vector<8x128xf32> to vector<1x128xf32>
    %21 = vector.broadcast %20 : vector<1x128xf32> to vector<8x128xf32>
    %22 = arith.addf %19, %21 : vector<8x128xf32>
    %c0_12 = arith.constant 0 : index
    %c0_13 = arith.constant 0 : index
    %23 = vector.load %arg5[%c0_12, %c0_13] : memref<8x128xf32, #tpu.memory_space<vmem>>, vector<8x128xf32>
    tpu.vector_store %arg5[%c0_12, %c0_13], %22 {strides = array<i32>} : memref<8x128xf32, #tpu.memory_space<vmem>>, vector<8x128xf32>,
    return
  }
  func.func @transform_0(%arg0: i32) -> (i32, i32) {
    %c0_i32 = arith.constant 0 : i32
    %c0_i32_0 = arith.constant 0 : i32
    return %arg0, %c0_i32 : i32, i32
  }
  func.func @transform_1(%arg0: i32) -> (i32, i32) {
    %c0_i32 = arith.constant 0 : i32
    %c0_i32_0 = arith.constant 0 : i32
    %c0_i32_1 = arith.constant 0 : i32
    return %c0_i32, %c0_i32_0 : i32, i32
  }
  func.func @transform_2(%arg0: i32) -> (i32, i32) {
    %c0_i32 = arith.constant 0 : i32
    %c0_i32_0 = arith.constant 0 : i32
    %c0_i32_1 = arith.constant 0 : i32
    return %c0_i32, %c0_i32_0 : i32, i32
  }
  func.func @transform_3(%arg0: i32) -> (i32, i32) {
    %c0_i32 = arith.constant 0 : i32
    %c0_i32_0 = arith.constant 0 : i32
    %c0_i32_1 = arith.constant 0 : i32
    return %c0_i32, %c0_i32_0 : i32, i32
  }
  func.func @transform_4(%arg0: i32) -> (i32, i32) {
    %c0_i32 = arith.constant 0 : i32
    %c0_i32_0 = arith.constant 0 : i32
    return %arg0, %c0_i32 : i32, i32
  }
}

module attributes {stable_mosaic.version = 11 : i64} {
  func.func @patch_embed_kernel(%arg0: i32, %arg1: memref<8x784xf32, #tpu.memory_space<vmem>>, %arg2: memref<784x128xf32, #tpu.memory_space<vmem>>, %arg3: memref<128x128xf32, #tpu.memory_space<vmem>>, %arg4: memref<8x128xf32, #tpu.memory_space<vmem>>, %arg5: memref<8x128xf32, #tpu.memory_space<vmem>>) attributes {dimension_semantics = [#tpu.dimension_semantics<parallel>], iteration_bounds = array<i64: 1>, scalar_prefetch = 0 : i64, scratch_operands = 0 : i64, tpu.core_type = #tpu.core_type<tc>, window_params = [{transform_indices = @transform_0, window_bounds = array<i64: 8, 784>}, {pipeline_mode = #tpu.pipeline_mode<synchronous>, transform_indices = @transform_1, window_bounds = array<i64: 784, 128>}, {pipeline_mode = #tpu.pipeline_mode<synchronous>, transform_indices = @transform_2, window_bounds = array<i64: 128, 128>}, {pipeline_mode = #tpu.pipeline_mode<synchronous>, transform_indices = @transform_3, window_bounds = array<i64: 8, 128>}, {transform_indices = @transform_4, window_bounds = array<i64: 8, 128>}]} {
    %c0 = arith.constant 0 : index
    %c0_0 = arith.constant 0 : index
    %0 = vector.load %arg1[%c0, %c0_0] : memref<8x784xf32, #tpu.memory_space<vmem>>, vector<8x784xf32>
    %c0_1 = arith.constant 0 : index
    %c0_2 = arith.constant 0 : index
    %1 = vector.load %arg2[%c0_1, %c0_2] : memref<784x128xf32, #tpu.memory_space<vmem>>, vector<784x128xf32>
    %cst = arith.constant dense<0.000000e+00> : vector<8x128xf32>
    %2 = tpu.matmul %0, %1, %cst {dimension_numbers = #tpu.dot_dimension_numbers<[1], [0], [0], [1], [0, 0, 1, 1], [], []>} : vector<8x784xf32>, vector<784x128xf32>, vector<8x128xf32> -> vector<8x128xf32>
    %c0_3 = arith.constant 0 : index
    %c0_4 = arith.constant 0 : index
    %3 = vector.load %arg4[%c0_3, %c0_4] : memref<8x128xf32, #tpu.memory_space<vmem>>, vector<8x128xf32>
    %4 = vector.extract_strided_slice %3 {offsets = [0, 0], sizes = [1, 128], strides = [1, 1]} : vector<8x128xf32> to vector<1x128xf32>
    %5 = vector.broadcast %4 : vector<1x128xf32> to vector<8x128xf32>
    %6 = arith.addf %2, %5 : vector<8x128xf32>
    %c0_5 = arith.constant 0 : index
    %c0_6 = arith.constant 0 : index
    %7 = vector.load %arg3[%c0_5, %c0_6] : memref<128x128xf32, #tpu.memory_space<vmem>>, vector<128x128xf32>
    %cst_7 = arith.constant dense<0.000000e+00> : vector<8x128xf32>
    %8 = tpu.matmul %6, %7, %cst_7 {dimension_numbers = #tpu.dot_dimension_numbers<[1], [0], [0], [1], [0, 0, 1, 1], [], []>} : vector<8x128xf32>, vector<128x128xf32>, vector<8x128xf32> -> vector<8x128xf32>
    %9 = arith.subf %6, %8 : vector<8x128xf32>
    %10 = arith.mulf %9, %9 : vector<8x128xf32>
    %c0_8 = arith.constant 0 : index
    %c0_9 = arith.constant 0 : index
    %11 = vector.load %arg3[%c0_8, %c0_9] : memref<128x128xf32, #tpu.memory_space<vmem>>, vector<128x128xf32>
    %cst_10 = arith.constant dense<0.000000e+00> : vector<8x128xf32>
    %12 = tpu.matmul %10, %11, %cst_10 {dimension_numbers = #tpu.dot_dimension_numbers<[1], [0], [0], [1], [0, 0, 1, 1], [], []>} : vector<8x128xf32>, vector<128x128xf32>, vector<8x128xf32> -> vector<8x128xf32>
    %13 = vector.extract_strided_slice %3 {offsets = [1, 0], sizes = [1, 128], strides = [1, 1]} : vector<8x128xf32> to vector<1x128xf32>
    %cst_11 = arith.constant 9.99999997E-7 : f32
    %14 = vector.broadcast %cst_11 : f32 to vector<8x128xf32>
    %15 = arith.addf %12, %14 : vector<8x128xf32>
    %16 = math.rsqrt %15 : vector<8x128xf32>
    %17 = vector.broadcast %13 : vector<1x128xf32> to vector<8x128xf32>
    %18 = arith.mulf %17, %16 : vector<8x128xf32>
    %19 = arith.mulf %9, %18 : vector<8x128xf32>
    %20 = vector.extract_strided_slice %3 {offsets = [2, 0], sizes = [1, 128], strides = [1, 1]} : vector<8x128xf32> to vector<1x128xf32>
    %21 = vector.broadcast %20 : vector<1x128xf32> to vector<8x128xf32>
    %22 = arith.addf %19, %21 : vector<8x128xf32>
    %c0_12 = arith.constant 0 : index
    %c0_13 = arith.constant 0 : index
    %23 = vector.load %arg5[%c0_12, %c0_13] : memref<8x128xf32, #tpu.memory_space<vmem>>, vector<8x128xf32>
    tpu.vector_store %arg5[%c0_12, %c0_13], %22 {strides = array<i32>} : memref<8x128xf32, #tpu.memory_space<vmem>>, vector<8x128xf32>,
    return
  }
  func.func @transform_0(%arg0: i32) -> (i32, i32) {
    %c0_i32 = arith.constant 0 : i32
    %c0_i32_0 = arith.constant 0 : i32
    return %arg0, %c0_i32 : i32, i32
  }
  func.func @transform_1(%arg0: i32) -> (i32, i32) {
    %c0_i32 = arith.constant 0 : i32
    %c0_i32_0 = arith.constant 0 : i32
    %c0_i32_1 = arith.constant 0 : i32
    return %c0_i32, %c0_i32_0 : i32, i32
  }
  func.func @transform_2(%arg0: i32) -> (i32, i32) {
    %c0_i32 = arith.constant 0 : i32
    %c0_i32_0 = arith.constant 0 : i32
    %c0_i32_1 = arith.constant 0 : i32
    return %c0_i32, %c0_i32_0 : i32, i32
  }
  func.func @transform_3(%arg0: i32) -> (i32, i32) {
    %c0_i32 = arith.constant 0 : i32
    %c0_i32_0 = arith.constant 0 : i32
    %c0_i32_1 = arith.constant 0 : i32
    return %c0_i32, %c0_i32_0 : i32, i32
  }
  func.func @transform_4(%arg0: i32) -> (i32, i32) {
    %c0_i32 = arith.constant 0 : i32
    %c0_i32_0 = arith.constant 0 : i32
    return %arg0, %c0_i32 : i32, i32
  }
}

</mosaic_0001>

<llo_original>
// kernel: tpu_custom_call.1
$region0: #{tpu_custom_call.1}
  #allocation0 [shape = 'u32[]', space=smem, size = 0x4, offset = 0x4, fixed_abs, tag = 'smem constant byte address 0x4 - core index']
  #allocation1 [shape = 'u32[72,128]{1,0:T(1,128)}', space=vmem, size = 0x9000, scoped, tag = 'internal scratch']
  %s0 = inlined_call_operand.hbm [shape: f32[8,784], index: 0, kind: input, shape index: {}]
  %s1 = inlined_call_operand.hbm [shape: f32[784,128], index: 1, kind: input, shape index: {}]
  %s2 = inlined_call_operand.hbm [shape: f32[128,128], index: 2, kind: input, shape index: {}]
  %s3 = inlined_call_operand.hbm [shape: f32[8,128], index: 3, kind: input, shape index: {}]
  %s4 = inlined_call_operand.hbm [shape: f32[8,128], index: 4, kind: output, shape index: {}]
  %s5 = sld [smem:[#allocation0]]
  $region42: #{tpu_custom_call.1} parent=0
    _
  %s7 = ssub.s32 1, %s5
  %s8 = scalar_select 0, %s7, %s5
  $region1: #{tpu_custom_call.1} parent=0
    #allocation2 [shape = 'u8[28672]{0}', space=vmem, size = 0x7000, scoped, tag = 'input window, operand 0, single buffered']
    #allocation3 [shape = 's32[1]{0}', space=sflag, size = 0x4, scoped, tag = 'scoped memory for tpu_custom_call.1']
    #allocation4 [shape = 's32[1]{0}', space=sflag, size = 0x4, scoped, tag = 'scoped memory for tpu_custom_call.1']
    #allocation5 [shape = 'u8[401408]{0}', space=vmem, size = 0x62000, scoped, tag = 'input window, operand 1, single buffered']
    #allocation6 [shape = 's32[1]{0}', space=sflag, size = 0x4, scoped, tag = 'scoped memory for tpu_custom_call.1']
    #allocation7 [shape = 'u8[65536]{0}', space=vmem, size = 0x10000, scoped, tag = 'input window, operand 2, single buffered']
    #allocation8 [shape = 'u8[4096]{0}', space=vmem, size = 0x1000, scoped, tag = 'input window, operand 3, single buffered']
    #allocation9 [shape = 's32[1]{0}', space=sflag, size = 0x4, scoped, tag = 'scoped memory for tpu_custom_call.1']
    #allocation10 [shape = 'u8[4096]{0}', space=vmem, size = 0x1000, scoped, tag = 'output window, operand 0, single buffered']
    %9 = vsyncpa [#allocation3], 0
    %10 = vsyncpa [#allocation6], 0
    %11 = vsyncpa [#allocation9], 0
    %12 = vsyncpa [#allocation4], 0
    // Predicated region
    $region2: #{tpu_custom_call.1} parent=1 // pred_check
      _
    $region3: #{tpu_custom_call.1} parent=1 // pred_check_branch
      %14 = sbr.rel (0) target = $region5
    $region4: #{tpu_custom_call.1} parent=1 // pred_region
      %16 = vsyncadd [#allocation3], 0
      %s18 = sshll.u32 %s0, 4
      %s19 = int_to_ptr.hbm [resolvable:$true] %s18
      %s20 = sshll.u32 [#allocation2], 4
      %s21 = int_to_ptr.vmem [resolvable:$true] %s20
      %23 = dma.hbm_to_vmem [thread:$0]  %s19, 896, %s21, [#allocation3]
    $region5: #{tpu_custom_call.1} parent=1 // pred_fallthru
      _
    // Predicated region
    $region6: #{tpu_custom_call.1} parent=1 // pred_check
      _
    $region7: #{tpu_custom_call.1} parent=1 // pred_check_branch
      %25 = sbr.rel (0) target = $region9
    $region8: #{tpu_custom_call.1} parent=1 // pred_region
      %27 = vsyncadd [#allocation6], 0
      %s28 = sshll.u32 %s1, 4
      %s29 = int_to_ptr.hbm [resolvable:$true] %s28
      %s30 = sshll.u32 [#allocation5], 4
      %s31 = int_to_ptr.vmem [resolvable:$true] %s30
      %36 = dma.hbm_to_vmem [thread:$0]  %s29, 12544, %s31, [#allocation6], 128, 128, 8
    $region9: #{tpu_custom_call.1} parent=1 // pred_fallthru
      _
    // Predicated region
    $region10: #{tpu_custom_call.1} parent=1 // pred_check
      _
    $region11: #{tpu_custom_call.1} parent=1 // pred_check_branch
      %38 = sbr.rel (0) target = $region13
    $region12: #{tpu_custom_call.1} parent=1 // pred_region
      %40 = vsyncadd [#allocation6], 0
      %s41 = sshll.u32 %s2, 4
      %s42 = int_to_ptr.hbm [resolvable:$true] %s41
      %s43 = sshll.u32 [#allocation7], 4
      %s44 = int_to_ptr.vmem [resolvable:$true] %s43
      %49 = dma.hbm_to_vmem [thread:$0]  %s42, 2048, %s44, [#allocation6], 128, 128, 8
    $region13: #{tpu_custom_call.1} parent=1 // pred_fallthru
      _
    // Predicated region
    $region14: #{tpu_custom_call.1} parent=1 // pred_check
      _
    $region15: #{tpu_custom_call.1} parent=1 // pred_check_branch
      %51 = sbr.rel (0) target = $region17
    $region16: #{tpu_custom_call.1} parent=1 // pred_region
      %53 = vsyncadd [#allocation9], 0
      %s55 = sshll.u32 %s3, 4
      %s56 = int_to_ptr.hbm [resolvable:$true] %s55
      %s57 = sshll.u32 [#allocation8], 4
      %s58 = int_to_ptr.vmem [resolvable:$true] %s57
      %60 = dma.hbm_to_vmem [thread:$0]  %s56, 128, %s58, [#allocation9]
    $region17: #{tpu_custom_call.1} parent=1 // pred_fallthru
      _
    // Predicated region
    $region18: #{tpu_custom_call.1} parent=1 // pred_check
      _
    $region19: #{tpu_custom_call.1} parent=1 // pred_check_branch
      %62 = sbr.rel (0) target = $region21
    $region20: #{tpu_custom_call.1} parent=1 // pred_region
      %64 = dma.done [#allocation3], 896
    $region21: #{tpu_custom_call.1} parent=1 // pred_fallthru
      _
    // Predicated region
    $region22: #{tpu_custom_call.1} parent=1 // pred_check
      _
    $region23: #{tpu_custom_call.1} parent=1 // pred_check_branch
      %66 = sbr.rel (0) target = $region25
    $region24: #{tpu_custom_call.1} parent=1 // pred_region
      %68 = dma.done [#allocation6], 12544
    $region25: #{tpu_custom_call.1} parent=1 // pred_fallthru
      _
    // Predicated region
    $region26: #{tpu_custom_call.1} parent=1 // pred_check
      _
    $region27: #{tpu_custom_call.1} parent=1 // pred_check_branch
      %70 = sbr.rel (0) target = $region29
    $region28: #{tpu_custom_call.1} parent=1 // pred_region
      %72 = dma.done [#allocation6], 2048
    $region29: #{tpu_custom_call.1} parent=1 // pred_fallthru
      _
    // Predicated region
    $region30: #{tpu_custom_call.1} parent=1 // pred_check
      _
    $region31: #{tpu_custom_call.1} parent=1 // pred_check_branch
      %74 = sbr.rel (0) target = $region33
    $region32: #{tpu_custom_call.1} parent=1 // pred_region
      %76 = dma.done [#allocation9], 128
    $region33: #{tpu_custom_call.1} parent=1 // pred_fallthru
      _
    %v77 = vld [vmem:[#allocation2] sm:$0xff]
    %v78 = vld [vmem:[#allocation2 + $0x8] sm:$0xff]
    %v79 = vld [vmem:[#allocation2 + $0x10] sm:$0xff]
    %v80 = vld [vmem:[#allocation2 + $0x18] sm:$0xff]
    %v81 = vld [vmem:[#allocation2 + $0x20] sm:$0xff]
    %v82 = vld [vmem:[#allocation2 + $0x28] sm:$0xff]
    %v83 = vld [vmem:[#allocation2 + $0x30] sm:$0xff]
    %v84 = vld [vmem:[#allocation5] sm:$0xff]
    %v85 = vld [vmem:[#allocation5 + $0x8] sm:$0xff]
    %v86 = vld [vmem:[#allocation5 + $0x10] sm:$0xff]
    %v87 = vld [vmem:[#allocation5 + $0x18] sm:$0xff]
    %v88 = vld [vmem:[#allocation5 + $0x20] sm:$0xff]
    %v89 = vld [vmem:[#allocation5 + $0x28] sm:$0xff]
    %v90 = vld [vmem:[#allocation5 + $0x30] sm:$0xff]
    %v91 = vld [vmem:[#allocation5 + $0x38] sm:$0xff]
    %v92 = vld [vmem:[#allocation5 + $0x40] sm:$0xff]
    %v93 = vld [vmem:[#allocation5 + $0x48] sm:$0xff]
    %v94 = vld [vmem:[#allocation5 + $0x50] sm:$0xff]
    %v95 = vld [vmem:[#allocation5 + $0x58] sm:$0xff]
    %v96 = vld [vmem:[#allocation5 + $0x60] sm:$0xff]
    %v97 = vld [vmem:[#allocation5 + $0x68] sm:$0xff]
    %v98 = vld [vmem:[#allocation5 + $0x70] sm:$0xff]
    %v99 = vld [vmem:[#allocation5 + $0x78] sm:$0xff]
    %v100 = vld [vmem:[#allocation5 + $0x80] sm:$0xff]
    %v101 = vld [vmem:[#allocation5 + $0x88] sm:$0xff]
    %v102 = vld [vmem:[#allocation5 + $0x90] sm:$0xff]
    %v103 = vld [vmem:[#allocation5 + $0x98] sm:$0xff]
    %v104 = vld [vmem:[#allocation5 + $0xa0] sm:$0xff]
    %v105 = vld [vmem:[#allocation5 + $0xa8] sm:$0xff]
    %v106 = vld [vmem:[#allocation5 + $0xb0] sm:$0xff]
    %v107 = vld [vmem:[#allocation5 + $0xb8] sm:$0xff]
    %v108 = vld [vmem:[#allocation5 + $0xc0] sm:$0xff]
    %v109 = vld [vmem:[#allocation5 + $0xc8] sm:$0xff]
    %v110 = vld [vmem:[#allocation5 + $0xd0] sm:$0xff]
    %v111 = vld [vmem:[#allocation5 + $0xd8] sm:$0xff]
    %v112 = vld [vmem:[#allocation5 + $0xe0] sm:$0xff]
    %v113 = vld [vmem:[#allocation5 + $0xe8] sm:$0xff]
    %v114 = vld [vmem:[#allocation5 + $0xf0] sm:$0xff]
    %v115 = vld [vmem:[#allocation5 + $0xf8] sm:$0xff]
    %v116 = vld [vmem:[#allocation5 + $0x100] sm:$0xff]
    %v117 = vld [vmem:[#allocation5 + $0x108] sm:$0xff]
    %v118 = vld [vmem:[#allocation5 + $0x110] sm:$0xff]
    %v119 = vld [vmem:[#allocation5 + $0x118] sm:$0xff]
    %v120 = vld [vmem:[#allocation5 + $0x120] sm:$0xff]
    %v121 = vld [vmem:[#allocation5 + $0x128] sm:$0xff]
    %v122 = vld [vmem:[#allocation5 + $0x130] sm:$0xff]
    %v123 = vld [vmem:[#allocation5 + $0x138] sm:$0xff]
    %v124 = vld [vmem:[#allocation5 + $0x140] sm:$0xff]
    %v125 = vld [vmem:[#allocation5 + $0x148] sm:$0xff]
    %v126 = vld [vmem:[#allocation5 + $0x150] sm:$0xff]
    %v127 = vld [vmem:[#allocation5 + $0x158] sm:$0xff]
    %v128 = vld [vmem:[#allocation5 + $0x160] sm:$0xff]
    %v129 = vld [vmem:[#allocation5 + $0x168] sm:$0xff]
    %v130 = vld [vmem:[#allocation5 + $0x170] sm:$0xff]
    %v131 = vld [vmem:[#allocation5 + $0x178] sm:$0xff]
    %v132 = vld [vmem:[#allocation5 + $0x180] sm:$0xff]
    %v133 = vld [vmem:[#allocation5 + $0x188] sm:$0xff]
    %v134 = vld [vmem:[#allocation5 + $0x190] sm:$0xff]
    %v135 = vld [vmem:[#allocation5 + $0x198] sm:$0xff]
    %v136 = vld [vmem:[#allocation5 + $0x1a0] sm:$0xff]
    %v137 = vld [vmem:[#allocation5 + $0x1a8] sm:$0xff]
    %v138 = vld [vmem:[#allocation5 + $0x1b0] sm:$0xff]
    %v139 = vld [vmem:[#allocation5 + $0x1b8] sm:$0xff]
    %v140 = vld [vmem:[#allocation5 + $0x1c0] sm:$0xff]
    %v141 = vld [vmem:[#allocation5 + $0x1c8] sm:$0xff]
    %v142 = vld [vmem:[#allocation5 + $0x1d0] sm:$0xff]
    %v143 = vld [vmem:[#allocation5 + $0x1d8] sm:$0xff]
    %v144 = vld [vmem:[#allocation5 + $0x1e0] sm:$0xff]
    %v145 = vld [vmem:[#allocation5 + $0x1e8] sm:$0xff]
    %v146 = vld [vmem:[#allocation5 + $0x1f0] sm:$0xff]
    %v147 = vld [vmem:[#allocation5 + $0x1f8] sm:$0xff]
    %v148 = vld [vmem:[#allocation5 + $0x200] sm:$0xff]
    %v149 = vld [vmem:[#allocation5 + $0x208] sm:$0xff]
    %v150 = vld [vmem:[#allocation5 + $0x210] sm:$0xff]
    %v151 = vld [vmem:[#allocation5 + $0x218] sm:$0xff]
    %v152 = vld [vmem:[#allocation5 + $0x220] sm:$0xff]
    %v153 = vld [vmem:[#allocation5 + $0x228] sm:$0xff]
    %v154 = vld [vmem:[#allocation5 + $0x230] sm:$0xff]
    %v155 = vld [vmem:[#allocation5 + $0x238] sm:$0xff]
    %v156 = vld [vmem:[#allocation5 + $0x240] sm:$0xff]
    %v157 = vld [vmem:[#allocation5 + $0x248] sm:$0xff]
    %v158 = vld [vmem:[#allocation5 + $0x250] sm:$0xff]
    %v159 = vld [vmem:[#allocation5 + $0x258] sm:$0xff]
    %v160 = vld [vmem:[#allocation5 + $0x260] sm:$0xff]
    %v161 = vld [vmem:[#allocation5 + $0x268] sm:$0xff]
    %v162 = vld [vmem:[#allocation5 + $0x270] sm:$0xff]
    %v163 = vld [vmem:[#allocation5 + $0x278] sm:$0xff]
    %v164 = vld [vmem:[#allocation5 + $0x280] sm:$0xff]
    %v165 = vld [vmem:[#allocation5 + $0x288] sm:$0xff]
    %v166 = vld [vmem:[#allocation5 + $0x290] sm:$0xff]
    %v167 = vld [vmem:[#allocation5 + $0x298] sm:$0xff]
    %v168 = vld [vmem:[#allocation5 + $0x2a0] sm:$0xff]
    %v169 = vld [vmem:[#allocation5 + $0x2a8] sm:$0xff]
    %v170 = vld [vmem:[#allocation5 + $0x2b0] sm:$0xff]
    %v171 = vld [vmem:[#allocation5 + $0x2b8] sm:$0xff]
    %v172 = vld [vmem:[#allocation5 + $0x2c0] sm:$0xff]
    %v173 = vld [vmem:[#allocation5 + $0x2c8] sm:$0xff]
    %v174 = vld [vmem:[#allocation5 + $0x2d0] sm:$0xff]
    %v175 = vld [vmem:[#allocation5 + $0x2d8] sm:$0xff]
    %v176 = vld [vmem:[#allocation5 + $0x2e0] sm:$0xff]
    %v177 = vld [vmem:[#allocation5 + $0x2e8] sm:$0xff]
    %v178 = vld [vmem:[#allocation5 + $0x2f0] sm:$0xff]
    %v179 = vld [vmem:[#allocation5 + $0x2f8] sm:$0xff]
    %v180 = vld [vmem:[#allocation5 + $0x300] sm:$0xff]
    %v181 = vld [vmem:[#allocation5 + $0x308] sm:$0xff]
    %v182 = vld [vmem:[#allocation8] sm:$0xff]
    %v183 = vperm.slane %v182, 0
    %vm184 = vcmask 130048
    %v186 = vsel %vm184, %v83, 0
    %188 = vmatpush.msra.mxu0 %v99
    %189 = vmatpush.msra.mxu0 %v98
    %190 = vmatpush.msra.mxu0 %v97
    %191 = vmatpush.msra.mxu0 %v96
    %192 = vmatpush.msra.mxu0 %v95
    %193 = vmatpush.msra.mxu0 %v94
    %194 = vmatpush.msra.mxu0 %v93
    %195 = vmatpush.msra.mxu0 %v92
    %196 = vmatpush.msra.mxu0 %v91
    %197 = vmatpush.msra.mxu0 %v90
    %198 = vmatpush.msra.mxu0 %v89
    %199 = vmatpush.msra.mxu0 %v88
    %200 = vmatpush.msra.mxu0 %v87
    %201 = vmatpush.msra.mxu0 %v86
    %202 = vmatpush.msra.mxu0 %v85
    %203 = vmatpush.msra.mxu0 %v84
    %204 = vmatmul.f32.gmra.mxu0 %v77
    %v205 = vpop.f32.mrf.mxu0
    %v206 = vadd.f32 %v183, %v205
    %207 = vdwg.mxu0
    %208 = vmatpush.msra.mxu0 %v115
    %209 = vmatpush.msra.mxu0 %v114
    %210 = vmatpush.msra.mxu0 %v113
    %211 = vmatpush.msra.mxu0 %v112
    %212 = vmatpush.msra.mxu0 %v111
    %213 = vmatpush.msra.mxu0 %v110
    %214 = vmatpush.msra.mxu0 %v109
    %215 = vmatpush.msra.mxu0 %v108
    %216 = vmatpush.msra.mxu0 %v107
    %217 = vmatpush.msra.mxu0 %v106
    %218 = vmatpush.msra.mxu0 %v105
    %219 = vmatpush.msra.mxu0 %v104
    %220 = vmatpush.msra.mxu0 %v103
    %221 = vmatpush.msra.mxu0 %v102
    %222 = vmatpush.msra.mxu0 %v101
    %223 = vmatpush.msra.mxu0 %v100
    %224 = vmatmul.f32.gmra.mxu0 %v78
    %v225 = vpop.f32.mrf.mxu0
    %v226 = vadd.f32 %v206, %v225
    %227 = vdwg.mxu0
    %228 = vmatpush.msra.mxu0 %v131
    %229 = vmatpush.msra.mxu0 %v130
    %230 = vmatpush.msra.mxu0 %v129
    %231 = vmatpush.msra.mxu0 %v128
    %232 = vmatpush.msra.mxu0 %v127
    %233 = vmatpush.msra.mxu0 %v126
    %234 = vmatpush.msra.mxu0 %v125
    %235 = vmatpush.msra.mxu0 %v124
    %236 = vmatpush.msra.mxu0 %v123
    %237 = vmatpush.msra.mxu0 %v122
    %238 = vmatpush.msra.mxu0 %v121
    %239 = vmatpush.msra.mxu0 %v120
    %240 = vmatpush.msra.mxu0 %v119
    %241 = vmatpush.msra.mxu0 %v118
    %242 = vmatpush.msra.mxu0 %v117
    %243 = vmatpush.msra.mxu0 %v116
    %244 = vmatmul.f32.gmra.mxu0 %v79
    %v245 = vpop.f32.mrf.mxu0
    %v246 = vadd.f32 %v226, %v245
    %247 = vdwg.mxu0
    %248 = vmatpush.msra.mxu0 %v147
    %249 = vmatpush.msra.mxu0 %v146
    %250 = vmatpush.msra.mxu0 %v145
    %251 = vmatpush.msra.mxu0 %v144
    %252 = vmatpush.msra.mxu0 %v143
    %253 = vmatpush.msra.mxu0 %v142
    %254 = vmatpush.msra.mxu0 %v141
    %255 = vmatpush.msra.mxu0 %v140
    %256 = vmatpush.msra.mxu0 %v139
    %257 = vmatpush.msra.mxu0 %v138
    %258 = vmatpush.msra.mxu0 %v137
    %259 = vmatpush.msra.mxu0 %v136
    %260 = vmatpush.msra.mxu0 %v135
    %261 = vmatpush.msra.mxu0 %v134
    %262 = vmatpush.msra.mxu0 %v133
    %263 = vmatpush.msra.mxu0 %v132
    %264 = vmatmul.f32.gmra.mxu0 %v80
    %v265 = vpop.f32.mrf.mxu0
    %v266 = vadd.f32 %v246, %v265
    %267 = vdwg.mxu0
    %268 = vmatpush.msra.mxu0 %v163
    %269 = vmatpush.msra.mxu0 %v162
    %270 = vmatpush.msra.mxu0 %v161
    %271 = vmatpush.msra.mxu0 %v160
    %272 = vmatpush.msra.mxu0 %v159
    %273 = vmatpush.msra.mxu0 %v158
    %274 = vmatpush.msra.mxu0 %v157
    %275 = vmatpush.msra.mxu0 %v156
    %276 = vmatpush.msra.mxu0 %v155
    %277 = vmatpush.msra.mxu0 %v154
    %278 = vmatpush.msra.mxu0 %v153
    %279 = vmatpush.msra.mxu0 %v152
    %280 = vmatpush.msra.mxu0 %v151
    %281 = vmatpush.msra.mxu0 %v150
    %282 = vmatpush.msra.mxu0 %v149
    %283 = vmatpush.msra.mxu0 %v148
    %284 = vmatmul.f32.gmra.mxu0 %v81
    %v285 = vpop.f32.mrf.mxu0
    %v286 = vadd.f32 %v266, %v285
    %287 = vdwg.mxu0
    %288 = vmatpush.msra.mxu0 %v179
    %289 = vmatpush.msra.mxu0 %v178
    %290 = vmatpush.msra.mxu0 %v177
    %291 = vmatpush.msra.mxu0 %v176
    %292 = vmatpush.msra.mxu0 %v175
    %293 = vmatpush.msra.mxu0 %v174
    %294 = vmatpush.msra.mxu0 %v173
    %295 = vmatpush.msra.mxu0 %v172
    %296 = vmatpush.msra.mxu0 %v171
    %297 = vmatpush.msra.mxu0 %v170
    %298 = vmatpush.msra.mxu0 %v169
    %299 = vmatpush.msra.mxu0 %v168
    %300 = vmatpush.msra.mxu0 %v167
    %301 = vmatpush.msra.mxu0 %v166
    %302 = vmatpush.msra.mxu0 %v165
    %303 = vmatpush.msra.mxu0 %v164
    %304 = vmatmul.f32.gmra.mxu0 %v82
    %v305 = vpop.f32.mrf.mxu0
    %v306 = vadd.f32 %v286, %v305
    %307 = vdwg.mxu0
    %308 = vmatpush.msra.mxu0 0.0
    %309 = vmatpush.msra.mxu0 0.0
    %310 = vmatpush.msra.mxu0 0.0
    %311 = vmatpush.msra.mxu0 0.0
    %312 = vmatpush.msra.mxu0 0.0
    %313 = vmatpush.msra.mxu0 0.0
    %314 = vmatpush.msra.mxu0 0.0
    %315 = vmatpush.msra.mxu0 0.0
    %316 = vmatpush.msra.mxu0 0.0
    %317 = vmatpush.msra.mxu0 0.0
    %318 = vmatpush.msra.mxu0 0.0
    %319 = vmatpush.msra.mxu0 0.0
    %320 = vmatpush.msra.mxu0 0.0
    %321 = vmatpush.msra.mxu0 0.0
    %322 = vmatpush.msra.mxu0 %v181
    %323 = vmatpush.msra.mxu0 %v180
    %324 = vmatmul.f32.gmra.mxu0 %v186
    %v325 = vpop.f32.mrf.mxu0
    %v326 = vadd.f32 %v306, %v325
    %327 = vdwg.mxu0
    %v328 = vld [vmem:[#allocation7] sm:$0xff]
    %v329 = vld [vmem:[#allocation7 + $0x8] sm:$0xff]
    %v330 = vld [vmem:[#allocation7 + $0x10] sm:$0xff]
    %v331 = vld [vmem:[#allocation7 + $0x18] sm:$0xff]
    %v332 = vld [vmem:[#allocation7 + $0x20] sm:$0xff]
    %v333 = vld [vmem:[#allocation7 + $0x28] sm:$0xff]
    %v334 = vld [vmem:[#allocation7 + $0x30] sm:$0xff]
    %v335 = vld [vmem:[#allocation7 + $0x38] sm:$0xff]
    %v336 = vld [vmem:[#allocation7 + $0x40] sm:$0xff]
    %v337 = vld [vmem:[#allocation7 + $0x48] sm:$0xff]
    %v338 = vld [vmem:[#allocation7 + $0x50] sm:$0xff]
    %v339 = vld [vmem:[#allocation7 + $0x58] sm:$0xff]
    %v340 = vld [vmem:[#allocation7 + $0x60] sm:$0xff]
    %v341 = vld [vmem:[#allocation7 + $0x68] sm:$0xff]
    %v342 = vld [vmem:[#allocation7 + $0x70] sm:$0xff]
    %v343 = vld [vmem:[#allocation7 + $0x78] sm:$0xff]
    %344 = vmatpush.msra.mxu0 %v343
    %345 = vmatpush.msra.mxu0 %v342
    %346 = vmatpush.msra.mxu0 %v341
    %347 = vmatpush.msra.mxu0 %v340
    %348 = vmatpush.msra.mxu0 %v339
    %349 = vmatpush.msra.mxu0 %v338
    %350 = vmatpush.msra.mxu0 %v337
    %351 = vmatpush.msra.mxu0 %v336
    %352 = vmatpush.msra.mxu0 %v335
    %353 = vmatpush.msra.mxu0 %v334
    %354 = vmatpush.msra.mxu0 %v333
    %355 = vmatpush.msra.mxu0 %v332
    %356 = vmatpush.msra.mxu0 %v331
    %357 = vmatpush.msra.mxu0 %v330
    %358 = vmatpush.msra.mxu0 %v329
    %359 = vmatpush.msra.mxu0 %v328
    %360 = vmatmul.f32.gmra.mxu0 %v326
    %v361 = vpop.f32.mrf.mxu0
    %v362 = vadd.f32 0.0, %v361
    %363 = vdwg.mxu0
    %v364 = vsub.f32 %v326, %v362
    %v365 = vmul.f32 %v364, %v364
    %366 = vmatpush.msra.mxu0 %v343
    %367 = vmatpush.msra.mxu0 %v342
    %368 = vmatpush.msra.mxu0 %v341
    %369 = vmatpush.msra.mxu0 %v340
    %370 = vmatpush.msra.mxu0 %v339
    %371 = vmatpush.msra.mxu0 %v338
    %372 = vmatpush.msra.mxu0 %v337
    %373 = vmatpush.msra.mxu0 %v336
    %374 = vmatpush.msra.mxu0 %v335
    %375 = vmatpush.msra.mxu0 %v334
    %376 = vmatpush.msra.mxu0 %v333
    %377 = vmatpush.msra.mxu0 %v332
    %378 = vmatpush.msra.mxu0 %v331
    %379 = vmatpush.msra.mxu0 %v330
    %380 = vmatpush.msra.mxu0 %v329
    %381 = vmatpush.msra.mxu0 %v328
    %382 = vmatmul.f32.gmra.mxu0 %v365
    %v383 = vpop.f32.mrf.mxu0
    %v384 = vadd.f32 1e-06, %v383
    %385 = vdwg.mxu0
    %v386 = vrsqrt.pop %v384
    %v387 = vmul.f32 %v386, %v384
    %v388 = vmul.f32 %v387, %v386
    %v389 = vmul.f32 0.5, %v388
    %v390 = vsub.f32 1.5, %v389
    %v391 = vmul.f32 %v386, %v390
    %vm392 = vweird.f32 %v384
    %vm393 = vweird.f32 %v386
    %vm394 = vmor %vm392, %vm393
    %v395 = vsel %vm394, %v386, %v391
    %v396 = vperm.slane %v182, 1
    %v397 = vmul.f32 %v396, %v395
    %v398 = vmul.f32 %v364, %v397
    %v399 = vperm.slane %v182, 2
    %v400 = vadd.f32 %v398, %v399
    %401 = vst [vmem:[#allocation10] sm:$0xff] %v400
    // Predicated region
    $region34: #{tpu_custom_call.1} parent=1 // pred_check
      _
    $region35: #{tpu_custom_call.1} parent=1 // pred_check_branch
      %403 = sbr.rel (0) target = $region37
    $region36: #{tpu_custom_call.1} parent=1 // pred_region
      %405 = vsyncadd [#allocation4], 0
      %s407 = sshll.u32 [#allocation10], 4
      %s408 = int_to_ptr.vmem [resolvable:$true] %s407
      %s409 = sshll.u32 %s4, 4
      %s410 = int_to_ptr.hbm [resolvable:$true] %s409
      %412 = dma.vmem_to_hbm [thread:$0]  %s408, 128, %s410, [#allocation4]
    $region37: #{tpu_custom_call.1} parent=1 // pred_fallthru
      _
    // Predicated region
    $region38: #{tpu_custom_call.1} parent=1 // pred_check
      _
    $region39: #{tpu_custom_call.1} parent=1 // pred_check_branch
      %414 = sbr.rel (0) target = $region41
    $region40: #{tpu_custom_call.1} parent=1 // pred_region
      %416 = dma.done [#allocation4], 128
    $region41: #{tpu_custom_call.1} parent=1 // pred_fallthru
      _
    %417 = vsyncpa [#allocation3], 1
    %418 = vsyncpa [#allocation6], 1
    %419 = vsyncpa [#allocation9], 1
    %420 = vsyncpa [#allocation4], 1

// kernel: tpu_custom_call.1
$region0: #{tpu_custom_call.1}
  #allocation0 [shape = 'u32[]', space=smem, size = 0x4, offset = 0x4, fixed_abs, tag = 'smem constant byte address 0x4 - core index']
  #allocation1 [shape = 'u32[72,128]{1,0:T(1,128)}', space=vmem, size = 0x9000, scoped, tag = 'internal scratch']
  %s0 = inlined_call_operand.hbm [shape: f32[8,784], index: 0, kind: input, shape index: {}]
  %s1 = inlined_call_operand.hbm [shape: f32[784,128], index: 1, kind: input, shape index: {}]
  %s2 = inlined_call_operand.hbm [shape: f32[128,128], index: 2, kind: input, shape index: {}]
  %s3 = inlined_call_operand.hbm [shape: f32[8,128], index: 3, kind: input, shape index: {}]
  %s4 = inlined_call_operand.hbm [shape: f32[8,128], index: 4, kind: output, shape index: {}]
  %s5 = sld [smem:[#allocation0]]
  $region42: #{tpu_custom_call.1} parent=0
    _
  %s7 = ssub.s32 1, %s5
  %s8 = scalar_select 0, %s7, %s5
  $region1: #{tpu_custom_call.1} parent=0
    #allocation2 [shape = 'u8[28672]{0}', space=vmem, size = 0x7000, scoped, tag = 'input window, operand 0, single buffered']
    #allocation3 [shape = 's32[1]{0}', space=sflag, size = 0x4, scoped, tag = 'scoped memory for tpu_custom_call.1']
    #allocation4 [shape = 's32[1]{0}', space=sflag, size = 0x4, scoped, tag = 'scoped memory for tpu_custom_call.1']
    #allocation5 [shape = 'u8[401408]{0}', space=vmem, size = 0x62000, scoped, tag = 'input window, operand 1, single buffered']
    #allocation6 [shape = 's32[1]{0}', space=sflag, size = 0x4, scoped, tag = 'scoped memory for tpu_custom_call.1']
    #allocation7 [shape = 'u8[65536]{0}', space=vmem, size = 0x10000, scoped, tag = 'input window, operand 2, single buffered']
    #allocation8 [shape = 'u8[4096]{0}', space=vmem, size = 0x1000, scoped, tag = 'input window, operand 3, single buffered']
    #allocation9 [shape = 's32[1]{0}', space=sflag, size = 0x4, scoped, tag = 'scoped memory for tpu_custom_call.1']
    #allocation10 [shape = 'u8[4096]{0}', space=vmem, size = 0x1000, scoped, tag = 'output window, operand 0, single buffered']
    %9 = vsyncpa [#allocation3], 0
    %10 = vsyncpa [#allocation6], 0
    %11 = vsyncpa [#allocation9], 0
    %12 = vsyncpa [#allocation4], 0
    // Predicated region
    $region2: #{tpu_custom_call.1} parent=1 // pred_check
      _
    $region3: #{tpu_custom_call.1} parent=1 // pred_check_branch
      %14 = sbr.rel (0) target = $region5
    $region4: #{tpu_custom_call.1} parent=1 // pred_region
      %16 = vsyncadd [#allocation3], 0
      %s18 = sshll.u32 %s0, 4
      %s19 = int_to_ptr.hbm [resolvable:$true] %s18
      %s20 = sshll.u32 [#allocation2], 4
      %s21 = int_to_ptr.vmem [resolvable:$true] %s20
      %23 = dma.hbm_to_vmem [thread:$0]  %s19, 896, %s21, [#allocation3]
    $region5: #{tpu_custom_call.1} parent=1 // pred_fallthru
      _
    // Predicated region
    $region6: #{tpu_custom_call.1} parent=1 // pred_check
      _
    $region7: #{tpu_custom_call.1} parent=1 // pred_check_branch
      %25 = sbr.rel (0) target = $region9
    $region8: #{tpu_custom_call.1} parent=1 // pred_region
      %27 = vsyncadd [#allocation6], 0
      %s28 = sshll.u32 %s1, 4
      %s29 = int_to_ptr.hbm [resolvable:$true] %s28
      %s30 = sshll.u32 [#allocation5], 4
      %s31 = int_to_ptr.vmem [resolvable:$true] %s30
      %36 = dma.hbm_to_vmem [thread:$0]  %s29, 12544, %s31, [#allocation6], 128, 128, 8
    $region9: #{tpu_custom_call.1} parent=1 // pred_fallthru
      _
    // Predicated region
    $region10: #{tpu_custom_call.1} parent=1 // pred_check
      _
    $region11: #{tpu_custom_call.1} parent=1 // pred_check_branch
      %38 = sbr.rel (0) target = $region13
    $region12: #{tpu_custom_call.1} parent=1 // pred_region
      %40 = vsyncadd [#allocation6], 0
      %s41 = sshll.u32 %s2, 4
      %s42 = int_to_ptr.hbm [resolvable:$true] %s41
      %s43 = sshll.u32 [#allocation7], 4
      %s44 = int_to_ptr.vmem [resolvable:$true] %s43
      %49 = dma.hbm_to_vmem [thread:$0]  %s42, 2048, %s44, [#allocation6], 128, 128, 8
    $region13: #{tpu_custom_call.1} parent=1 // pred_fallthru
      _
    // Predicated region
    $region14: #{tpu_custom_call.1} parent=1 // pred_check
      _
    $region15: #{tpu_custom_call.1} parent=1 // pred_check_branch
      %51 = sbr.rel (0) target = $region17
    $region16: #{tpu_custom_call.1} parent=1 // pred_region
      %53 = vsyncadd [#allocation9], 0
      %s55 = sshll.u32 %s3, 4
      %s56 = int_to_ptr.hbm [resolvable:$true] %s55
      %s57 = sshll.u32 [#allocation8], 4
      %s58 = int_to_ptr.vmem [resolvable:$true] %s57
      %60 = dma.hbm_to_vmem [thread:$0]  %s56, 128, %s58, [#allocation9]
    $region17: #{tpu_custom_call.1} parent=1 // pred_fallthru
      _
    // Predicated region
    $region18: #{tpu_custom_call.1} parent=1 // pred_check
      _
    $region19: #{tpu_custom_call.1} parent=1 // pred_check_branch
      %62 = sbr.rel (0) target = $region21
    $region20: #{tpu_custom_call.1} parent=1 // pred_region
      %64 = dma.done [#allocation3], 896
    $region21: #{tpu_custom_call.1} parent=1 // pred_fallthru
      _
    // Predicated region
    $region22: #{tpu_custom_call.1} parent=1 // pred_check
      _
    $region23: #{tpu_custom_call.1} parent=1 // pred_check_branch
      %66 = sbr.rel (0) target = $region25
    $region24: #{tpu_custom_call.1} parent=1 // pred_region
      %68 = dma.done [#allocation6], 12544
    $region25: #{tpu_custom_call.1} parent=1 // pred_fallthru
      _
    // Predicated region
    $region26: #{tpu_custom_call.1} parent=1 // pred_check
      _
    $region27: #{tpu_custom_call.1} parent=1 // pred_check_branch
      %70 = sbr.rel (0) target = $region29
    $region28: #{tpu_custom_call.1} parent=1 // pred_region
      %72 = dma.done [#allocation6], 2048
    $region29: #{tpu_custom_call.1} parent=1 // pred_fallthru
      _
    // Predicated region
    $region30: #{tpu_custom_call.1} parent=1 // pred_check
      _
    $region31: #{tpu_custom_call.1} parent=1 // pred_check_branch
      %74 = sbr.rel (0) target = $region33
    $region32: #{tpu_custom_call.1} parent=1 // pred_region
      %76 = dma.done [#allocation9], 128
    $region33: #{tpu_custom_call.1} parent=1 // pred_fallthru
      _
    %v77 = vld [vmem:[#allocation2] sm:$0xff]
    %v78 = vld [vmem:[#allocation2 + $0x8] sm:$0xff]
    %v79 = vld [vmem:[#allocation2 + $0x10] sm:$0xff]
    %v80 = vld [vmem:[#allocation2 + $0x18] sm:$0xff]
    %v81 = vld [vmem:[#allocation2 + $0x20] sm:$0xff]
    %v82 = vld [vmem:[#allocation2 + $0x28] sm:$0xff]
    %v83 = vld [vmem:[#allocation2 + $0x30] sm:$0xff]
    %v84 = vld [vmem:[#allocation5] sm:$0xff]
    %v85 = vld [vmem:[#allocation5 + $0x8] sm:$0xff]
    %v86 = vld [vmem:[#allocation5 + $0x10] sm:$0xff]
    %v87 = vld [vmem:[#allocation5 + $0x18] sm:$0xff]
    %v88 = vld [vmem:[#allocation5 + $0x20] sm:$0xff]
    %v89 = vld [vmem:[#allocation5 + $0x28] sm:$0xff]
    %v90 = vld [vmem:[#allocation5 + $0x30] sm:$0xff]
    %v91 = vld [vmem:[#allocation5 + $0x38] sm:$0xff]
    %v92 = vld [vmem:[#allocation5 + $0x40] sm:$0xff]
    %v93 = vld [vmem:[#allocation5 + $0x48] sm:$0xff]
    %v94 = vld [vmem:[#allocation5 + $0x50] sm:$0xff]
    %v95 = vld [vmem:[#allocation5 + $0x58] sm:$0xff]
    %v96 = vld [vmem:[#allocation5 + $0x60] sm:$0xff]
    %v97 = vld [vmem:[#allocation5 + $0x68] sm:$0xff]
    %v98 = vld [vmem:[#allocation5 + $0x70] sm:$0xff]
    %v99 = vld [vmem:[#allocation5 + $0x78] sm:$0xff]
    %v100 = vld [vmem:[#allocation5 + $0x80] sm:$0xff]
    %v101 = vld [vmem:[#allocation5 + $0x88] sm:$0xff]
    %v102 = vld [vmem:[#allocation5 + $0x90] sm:$0xff]
    %v103 = vld [vmem:[#allocation5 + $0x98] sm:$0xff]
    %v104 = vld [vmem:[#allocation5 + $0xa0] sm:$0xff]
    %v105 = vld [vmem:[#allocation5 + $0xa8] sm:$0xff]
    %v106 = vld [vmem:[#allocation5 + $0xb0] sm:$0xff]
    %v107 = vld [vmem:[#allocation5 + $0xb8] sm:$0xff]
    %v108 = vld [vmem:[#allocation5 + $0xc0] sm:$0xff]
    %v109 = vld [vmem:[#allocation5 + $0xc8] sm:$0xff]
    %v110 = vld [vmem:[#allocation5 + $0xd0] sm:$0xff]
    %v111 = vld [vmem:[#allocation5 + $0xd8] sm:$0xff]
    %v112 = vld [vmem:[#allocation5 + $0xe0] sm:$0xff]
    %v113 = vld [vmem:[#allocation5 + $0xe8] sm:$0xff]
    %v114 = vld [vmem:[#allocation5 + $0xf0] sm:$0xff]
    %v115 = vld [vmem:[#allocation5 + $0xf8] sm:$0xff]
    %v116 = vld [vmem:[#allocation5 + $0x100] sm:$0xff]
    %v117 = vld [vmem:[#allocation5 + $0x108] sm:$0xff]
    %v118 = vld [vmem:[#allocation5 + $0x110] sm:$0xff]
    %v119 = vld [vmem:[#allocation5 + $0x118] sm:$0xff]
    %v120 = vld [vmem:[#allocation5 + $0x120] sm:$0xff]
    %v121 = vld [vmem:[#allocation5 + $0x128] sm:$0xff]
    %v122 = vld [vmem:[#allocation5 + $0x130] sm:$0xff]
    %v123 = vld [vmem:[#allocation5 + $0x138] sm:$0xff]
    %v124 = vld [vmem:[#allocation5 + $0x140] sm:$0xff]
    %v125 = vld [vmem:[#allocation5 + $0x148] sm:$0xff]
    %v126 = vld [vmem:[#allocation5 + $0x150] sm:$0xff]
    %v127 = vld [vmem:[#allocation5 + $0x158] sm:$0xff]
    %v128 = vld [vmem:[#allocation5 + $0x160] sm:$0xff]
    %v129 = vld [vmem:[#allocation5 + $0x168] sm:$0xff]
    %v130 = vld [vmem:[#allocation5 + $0x170] sm:$0xff]
    %v131 = vld [vmem:[#allocation5 + $0x178] sm:$0xff]
    %v132 = vld [vmem:[#allocation5 + $0x180] sm:$0xff]
    %v133 = vld [vmem:[#allocation5 + $0x188] sm:$0xff]
    %v134 = vld [vmem:[#allocation5 + $0x190] sm:$0xff]
    %v135 = vld [vmem:[#allocation5 + $0x198] sm:$0xff]
    %v136 = vld [vmem:[#allocation5 + $0x1a0] sm:$0xff]
    %v137 = vld [vmem:[#allocation5 + $0x1a8] sm:$0xff]
    %v138 = vld [vmem:[#allocation5 + $0x1b0] sm:$0xff]
    %v139 = vld [vmem:[#allocation5 + $0x1b8] sm:$0xff]
    %v140 = vld [vmem:[#allocation5 + $0x1c0] sm:$0xff]
    %v141 = vld [vmem:[#allocation5 + $0x1c8] sm:$0xff]
    %v142 = vld [vmem:[#allocation5 + $0x1d0] sm:$0xff]
    %v143 = vld [vmem:[#allocation5 + $0x1d8] sm:$0xff]
    %v144 = vld [vmem:[#allocation5 + $0x1e0] sm:$0xff]
    %v145 = vld [vmem:[#allocation5 + $0x1e8] sm:$0xff]
    %v146 = vld [vmem:[#allocation5 + $0x1f0] sm:$0xff]
    %v147 = vld [vmem:[#allocation5 + $0x1f8] sm:$0xff]
    %v148 = vld [vmem:[#allocation5 + $0x200] sm:$0xff]
    %v149 = vld [vmem:[#allocation5 + $0x208] sm:$0xff]
    %v150 = vld [vmem:[#allocation5 + $0x210] sm:$0xff]
    %v151 = vld [vmem:[#allocation5 + $0x218] sm:$0xff]
    %v152 = vld [vmem:[#allocation5 + $0x220] sm:$0xff]
    %v153 = vld [vmem:[#allocation5 + $0x228] sm:$0xff]
    %v154 = vld [vmem:[#allocation5 + $0x230] sm:$0xff]
    %v155 = vld [vmem:[#allocation5 + $0x238] sm:$0xff]
    %v156 = vld [vmem:[#allocation5 + $0x240] sm:$0xff]
    %v157 = vld [vmem:[#allocation5 + $0x248] sm:$0xff]
    %v158 = vld [vmem:[#allocation5 + $0x250] sm:$0xff]
    %v159 = vld [vmem:[#allocation5 + $0x258] sm:$0xff]
    %v160 = vld [vmem:[#allocation5 + $0x260] sm:$0xff]
    %v161 = vld [vmem:[#allocation5 + $0x268] sm:$0xff]
    %v162 = vld [vmem:[#allocation5 + $0x270] sm:$0xff]
    %v163 = vld [vmem:[#allocation5 + $0x278] sm:$0xff]
    %v164 = vld [vmem:[#allocation5 + $0x280] sm:$0xff]
    %v165 = vld [vmem:[#allocation5 + $0x288] sm:$0xff]
    %v166 = vld [vmem:[#allocation5 + $0x290] sm:$0xff]
    %v167 = vld [vmem:[#allocation5 + $0x298] sm:$0xff]
    %v168 = vld [vmem:[#allocation5 + $0x2a0] sm:$0xff]
    %v169 = vld [vmem:[#allocation5 + $0x2a8] sm:$0xff]
    %v170 = vld [vmem:[#allocation5 + $0x2b0] sm:$0xff]
    %v171 = vld [vmem:[#allocation5 + $0x2b8] sm:$0xff]
    %v172 = vld [vmem:[#allocation5 + $0x2c0] sm:$0xff]
    %v173 = vld [vmem:[#allocation5 + $0x2c8] sm:$0xff]
    %v174 = vld [vmem:[#allocation5 + $0x2d0] sm:$0xff]
    %v175 = vld [vmem:[#allocation5 + $0x2d8] sm:$0xff]
    %v176 = vld [vmem:[#allocation5 + $0x2e0] sm:$0xff]
    %v177 = vld [vmem:[#allocation5 + $0x2e8] sm:$0xff]
    %v178 = vld [vmem:[#allocation5 + $0x2f0] sm:$0xff]
    %v179 = vld [vmem:[#allocation5 + $0x2f8] sm:$0xff]
    %v180 = vld [vmem:[#allocation5 + $0x300] sm:$0xff]
    %v181 = vld [vmem:[#allocation5 + $0x308] sm:$0xff]
    %v182 = vld [vmem:[#allocation8] sm:$0xff]
    %v183 = vperm.slane %v182, 0
    %vm184 = vcmask 130048
    %v186 = vsel %vm184, %v83, 0
    %188 = vmatpush.msra.mxu0 %v99
    %189 = vmatpush.msra.mxu0 %v98
    %190 = vmatpush.msra.mxu0 %v97
    %191 = vmatpush.msra.mxu0 %v96
    %192 = vmatpush.msra.mxu0 %v95
    %193 = vmatpush.msra.mxu0 %v94
    %194 = vmatpush.msra.mxu0 %v93
    %195 = vmatpush.msra.mxu0 %v92
    %196 = vmatpush.msra.mxu0 %v91
    %197 = vmatpush.msra.mxu0 %v90
    %198 = vmatpush.msra.mxu0 %v89
    %199 = vmatpush.msra.mxu0 %v88
    %200 = vmatpush.msra.mxu0 %v87
    %201 = vmatpush.msra.mxu0 %v86
    %202 = vmatpush.msra.mxu0 %v85
    %203 = vmatpush.msra.mxu0 %v84
    %204 = vmatmul.f32.gmra.mxu0 %v77
    %v205 = vpop.f32.mrf.mxu0
    %v206 = vadd.f32 %v183, %v205
    %207 = vdwg.mxu0
    %208 = vmatpush.msra.mxu0 %v115
    %209 = vmatpush.msra.mxu0 %v114
    %210 = vmatpush.msra.mxu0 %v113
    %211 = vmatpush.msra.mxu0 %v112
    %212 = vmatpush.msra.mxu0 %v111
    %213 = vmatpush.msra.mxu0 %v110
    %214 = vmatpush.msra.mxu0 %v109
    %215 = vmatpush.msra.mxu0 %v108
    %216 = vmatpush.msra.mxu0 %v107
    %217 = vmatpush.msra.mxu0 %v106
    %218 = vmatpush.msra.mxu0 %v105
    %219 = vmatpush.msra.mxu0 %v104
    %220 = vmatpush.msra.mxu0 %v103
    %221 = vmatpush.msra.mxu0 %v102
    %222 = vmatpush.msra.mxu0 %v101
    %223 = vmatpush.msra.mxu0 %v100
    %224 = vmatmul.f32.gmra.mxu0 %v78
    %v225 = vpop.f32.mrf.mxu0
    %v226 = vadd.f32 %v206, %v225
    %227 = vdwg.mxu0
    %228 = vmatpush.msra.mxu0 %v131
    %229 = vmatpush.msra.mxu0 %v130
    %230 = vmatpush.msra.mxu0 %v129
    %231 = vmatpush.msra.mxu0 %v128
    %232 = vmatpush.msra.mxu0 %v127
    %233 = vmatpush.msra.mxu0 %v126
    %234 = vmatpush.msra.mxu0 %v125
    %235 = vmatpush.msra.mxu0 %v124
    %236 = vmatpush.msra.mxu0 %v123
    %237 = vmatpush.msra.mxu0 %v122
    %238 = vmatpush.msra.mxu0 %v121
    %239 = vmatpush.msra.mxu0 %v120
    %240 = vmatpush.msra.mxu0 %v119
    %241 = vmatpush.msra.mxu0 %v118
    %242 = vmatpush.msra.mxu0 %v117
    %243 = vmatpush.msra.mxu0 %v116
    %244 = vmatmul.f32.gmra.mxu0 %v79
    %v245 = vpop.f32.mrf.mxu0
    %v246 = vadd.f32 %v226, %v245
    %247 = vdwg.mxu0
    %248 = vmatpush.msra.mxu0 %v147
    %249 = vmatpush.msra.mxu0 %v146
    %250 = vmatpush.msra.mxu0 %v145
    %251 = vmatpush.msra.mxu0 %v144
    %252 = vmatpush.msra.mxu0 %v143
    %253 = vmatpush.msra.mxu0 %v142
    %254 = vmatpush.msra.mxu0 %v141
    %255 = vmatpush.msra.mxu0 %v140
    %256 = vmatpush.msra.mxu0 %v139
    %257 = vmatpush.msra.mxu0 %v138
    %258 = vmatpush.msra.mxu0 %v137
    %259 = vmatpush.msra.mxu0 %v136
    %260 = vmatpush.msra.mxu0 %v135
    %261 = vmatpush.msra.mxu0 %v134
    %262 = vmatpush.msra.mxu0 %v133
    %263 = vmatpush.msra.mxu0 %v132
    %264 = vmatmul.f32.gmra.mxu0 %v80
    %v265 = vpop.f32.mrf.mxu0
    %v266 = vadd.f32 %v246, %v265
    %267 = vdwg.mxu0
    %268 = vmatpush.msra.mxu0 %v163
    %269 = vmatpush.msra.mxu0 %v162
    %270 = vmatpush.msra.mxu0 %v161
    %271 = vmatpush.msra.mxu0 %v160
    %272 = vmatpush.msra.mxu0 %v159
    %273 = vmatpush.msra.mxu0 %v158
    %274 = vmatpush.msra.mxu0 %v157
    %275 = vmatpush.msra.mxu0 %v156
    %276 = vmatpush.msra.mxu0 %v155
    %277 = vmatpush.msra.mxu0 %v154
    %278 = vmatpush.msra.mxu0 %v153
    %279 = vmatpush.msra.mxu0 %v152
    %280 = vmatpush.msra.mxu0 %v151
    %281 = vmatpush.msra.mxu0 %v150
    %282 = vmatpush.msra.mxu0 %v149
    %283 = vmatpush.msra.mxu0 %v148
    %284 = vmatmul.f32.gmra.mxu0 %v81
    %v285 = vpop.f32.mrf.mxu0
    %v286 = vadd.f32 %v266, %v285
    %287 = vdwg.mxu0
    %288 = vmatpush.msra.mxu0 %v179
    %289 = vmatpush.msra.mxu0 %v178
    %290 = vmatpush.msra.mxu0 %v177
    %291 = vmatpush.msra.mxu0 %v176
    %292 = vmatpush.msra.mxu0 %v175
    %293 = vmatpush.msra.mxu0 %v174
    %294 = vmatpush.msra.mxu0 %v173
    %295 = vmatpush.msra.mxu0 %v172
    %296 = vmatpush.msra.mxu0 %v171
    %297 = vmatpush.msra.mxu0 %v170
    %298 = vmatpush.msra.mxu0 %v169
    %299 = vmatpush.msra.mxu0 %v168
    %300 = vmatpush.msra.mxu0 %v167
    %301 = vmatpush.msra.mxu0 %v166
    %302 = vmatpush.msra.mxu0 %v165
    %303 = vmatpush.msra.mxu0 %v164
    %304 = vmatmul.f32.gmra.mxu0 %v82
    %v305 = vpop.f32.mrf.mxu0
    %v306 = vadd.f32 %v286, %v305
    %307 = vdwg.mxu0
    %308 = vmatpush.msra.mxu0 0.0
    %309 = vmatpush.msra.mxu0 0.0
    %310 = vmatpush.msra.mxu0 0.0
    %311 = vmatpush.msra.mxu0 0.0
    %312 = vmatpush.msra.mxu0 0.0
    %313 = vmatpush.msra.mxu0 0.0
    %314 = vmatpush.msra.mxu0 0.0
    %315 = vmatpush.msra.mxu0 0.0
    %316 = vmatpush.msra.mxu0 0.0
    %317 = vmatpush.msra.mxu0 0.0
    %318 = vmatpush.msra.mxu0 0.0
    %319 = vmatpush.msra.mxu0 0.0
    %320 = vmatpush.msra.mxu0 0.0
    %321 = vmatpush.msra.mxu0 0.0
    %322 = vmatpush.msra.mxu0 %v181
    %323 = vmatpush.msra.mxu0 %v180
    %324 = vmatmul.f32.gmra.mxu0 %v186
    %v325 = vpop.f32.mrf.mxu0
    %v326 = vadd.f32 %v306, %v325
    %327 = vdwg.mxu0
    %v328 = vld [vmem:[#allocation7] sm:$0xff]
    %v329 = vld [vmem:[#allocation7 + $0x8] sm:$0xff]
    %v330 = vld [vmem:[#allocation7 + $0x10] sm:$0xff]
    %v331 = vld [vmem:[#allocation7 + $0x18] sm:$0xff]
    %v332 = vld [vmem:[#allocation7 + $0x20] sm:$0xff]
    %v333 = vld [vmem:[#allocation7 + $0x28] sm:$0xff]
    %v334 = vld [vmem:[#allocation7 + $0x30] sm:$0xff]
    %v335 = vld [vmem:[#allocation7 + $0x38] sm:$0xff]
    %v336 = vld [vmem:[#allocation7 + $0x40] sm:$0xff]
    %v337 = vld [vmem:[#allocation7 + $0x48] sm:$0xff]
    %v338 = vld [vmem:[#allocation7 + $0x50] sm:$0xff]
    %v339 = vld [vmem:[#allocation7 + $0x58] sm:$0xff]
    %v340 = vld [vmem:[#allocation7 + $0x60] sm:$0xff]
    %v341 = vld [vmem:[#allocation7 + $0x68] sm:$0xff]
    %v342 = vld [vmem:[#allocation7 + $0x70] sm:$0xff]
    %v343 = vld [vmem:[#allocation7 + $0x78] sm:$0xff]
    %344 = vmatpush.msra.mxu0 %v343
    %345 = vmatpush.msra.mxu0 %v342
    %346 = vmatpush.msra.mxu0 %v341
    %347 = vmatpush.msra.mxu0 %v340
    %348 = vmatpush.msra.mxu0 %v339
    %349 = vmatpush.msra.mxu0 %v338
    %350 = vmatpush.msra.mxu0 %v337
    %351 = vmatpush.msra.mxu0 %v336
    %352 = vmatpush.msra.mxu0 %v335
    %353 = vmatpush.msra.mxu0 %v334
    %354 = vmatpush.msra.mxu0 %v333
    %355 = vmatpush.msra.mxu0 %v332
    %356 = vmatpush.msra.mxu0 %v331
    %357 = vmatpush.msra.mxu0 %v330
    %358 = vmatpush.msra.mxu0 %v329
    %359 = vmatpush.msra.mxu0 %v328
    %360 = vmatmul.f32.gmra.mxu0 %v326
    %v361 = vpop.f32.mrf.mxu0
    %v362 = vadd.f32 0.0, %v361
    %363 = vdwg.mxu0
    %v364 = vsub.f32 %v326, %v362
    %v365 = vmul.f32 %v364, %v364
    %366 = vmatpush.msra.mxu0 %v343
    %367 = vmatpush.msra.mxu0 %v342
    %368 = vmatpush.msra.mxu0 %v341
    %369 = vmatpush.msra.mxu0 %v340
    %370 = vmatpush.msra.mxu0 %v339
    %371 = vmatpush.msra.mxu0 %v338
    %372 = vmatpush.msra.mxu0 %v337
    %373 = vmatpush.msra.mxu0 %v336
    %374 = vmatpush.msra.mxu0 %v335
    %375 = vmatpush.msra.mxu0 %v334
    %376 = vmatpush.msra.mxu0 %v333
    %377 = vmatpush.msra.mxu0 %v332
    %378 = vmatpush.msra.mxu0 %v331
    %379 = vmatpush.msra.mxu0 %v330
    %380 = vmatpush.msra.mxu0 %v329
    %381 = vmatpush.msra.mxu0 %v328
    %382 = vmatmul.f32.gmra.mxu0 %v365
    %v383 = vpop.f32.mrf.mxu0
    %v384 = vadd.f32 1e-06, %v383
    %385 = vdwg.mxu0
    %v386 = vrsqrt.pop %v384
    %v387 = vmul.f32 %v386, %v384
    %v388 = vmul.f32 %v387, %v386
    %v389 = vmul.f32 0.5, %v388
    %v390 = vsub.f32 1.5, %v389
    %v391 = vmul.f32 %v386, %v390
    %vm392 = vweird.f32 %v384
    %vm393 = vweird.f32 %v386
    %vm394 = vmor %vm392, %vm393
    %v395 = vsel %vm394, %v386, %v391
    %v396 = vperm.slane %v182, 1
    %v397 = vmul.f32 %v396, %v395
    %v398 = vmul.f32 %v364, %v397
    %v399 = vperm.slane %v182, 2
    %v400 = vadd.f32 %v398, %v399
    %401 = vst [vmem:[#allocation10] sm:$0xff] %v400
    // Predicated region
    $region34: #{tpu_custom_call.1} parent=1 // pred_check
      _
    $region35: #{tpu_custom_call.1} parent=1 // pred_check_branch
      %403 = sbr.rel (0) target = $region37
    $region36: #{tpu_custom_call.1} parent=1 // pred_region
      %405 = vsyncadd [#allocation4], 0
      %s407 = sshll.u32 [#allocation10], 4
      %s408 = int_to_ptr.vmem [resolvable:$true] %s407
      %s409 = sshll.u32 %s4, 4
      %s410 = int_to_ptr.hbm [resolvable:$true] %s409
      %412 = dma.vmem_to_hbm [thread:$0]  %s408, 128, %s410, [#allocation4]
    $region37: #{tpu_custom_call.1} parent=1 // pred_fallthru
      _
    // Predicated region
    $region38: #{tpu_custom_call.1} parent=1 // pred_check
      _
    $region39: #{tpu_custom_call.1} parent=1 // pred_check_branch
      %414 = sbr.rel (0) target = $region41
    $region40: #{tpu_custom_call.1} parent=1 // pred_region
      %416 = dma.done [#allocation4], 128
    $region41: #{tpu_custom_call.1} parent=1 // pred_fallthru
      _
    %417 = vsyncpa [#allocation3], 1
    %418 = vsyncpa [#allocation6], 1
    %419 = vsyncpa [#allocation9], 1
    %420 = vsyncpa [#allocation4], 1

</llo_original>
